<compile_context>
chip_gen: v7x
topology: tpu7x:2x2x1
jax: 0.10.0
libtpu: 0.0.40
codegen_flags: <defaults>
</compile_context>

<pallas_src>
import functools

import jax
import jax.numpy as jnp
from jax import lax
from jax.experimental import pallas as pl
from jax.experimental.pallas import tpu as pltpu


# ------------------------------ dropout kernel ------------------------------

def _dropout_kernel(x_ref, u_ref, o_ref, *, p):
    x = x_ref[...].astype(jnp.float32)
    if p <= 0.0:                                   # static python branch
        o_ref[...] = x.astype(o_ref.dtype)
    else:
        keep = u_ref[...] >= jnp.float32(p)        # keep w.p. (1 - p)
        scale = jnp.float32(1.0 / (1.0 - p))
        o_ref[...] = jnp.where(keep, x * scale, 0.0).astype(o_ref.dtype)


# -------------------- relative-position embedding kernel --------------------

def _relpos_kernel(ext_ref, rel_ref, *, tq, seq):
    # rel[qi, kj, :] = ext[(seq - 1 - qi) + kj, :]
    # -> each output row is a contiguous (seq, D) window of the extended table.
    q0 = pl.program_id(0) * tq

    def body(r, carry):
        qi = jnp.minimum(q0 + r, seq - 1)          # clamp for padded last block
        start = seq - 1 - qi
        rel_ref[r] = ext_ref[pl.ds(start, seq), :]
        return carry

    lax.fori_loop(0, tq, body, 0, unroll=(tq <= 16))


# --------------------------------- wrappers ---------------------------------

def _choose_q_tile(seq, d, budget_bytes=8 << 20):
    """Query rows per rel-output block so a double-buffered block is ~<=16 MiB
    (fits v7x's 64 MiB VMEM with plenty of headroom)."""
    row_bytes = seq * d * 4
    tq = max(1, min(seq, budget_bytes // max(row_bytes, 1)))
    while seq % tq:                                # avoid padded last block
        tq -= 1
    return tq


def _choose_row_tile(rows, d, budget_bytes=4 << 20):
    """Row tile for the dropout pass; multiple of 8 (or the full extent)."""
    if rows <= 8 or rows % 8:
        return rows
    tr = min(rows, max(8, (budget_bytes // (d * 4)) // 8 * 8))
    while rows % tr:
        tr -= 8
    return tr


def relative_positional_encoding(x, table, key, *, p=0.1, max_rel=32,
                                 tq=None, tr=None):
    """x: (B, S, D); table: (2*max_rel+1, D); key: jax PRNG key for dropout."""
    assert 0.0 <= p < 1.0, "dropout p must be in [0, 1)"
    B, S, D = x.shape
    K = max_rel

    # ---- dropout(x): gridded over (B*S) row blocks, lane axis = D ----
    rows = B * S
    x2 = x.reshape(rows, D)
    tr = tr or _choose_row_tile(rows, D)
    u = jax.random.uniform(key, (rows, D), dtype=jnp.float32)
    x_drop = pl.pallas_call(
        functools.partial(_dropout_kernel, p=p),
        out_shape=jax.ShapeDtypeStruct((rows, D), x.dtype),
        grid=(pl.cdiv(rows, tr),),
        in_specs=[pl.BlockSpec((tr, D), lambda i: (i, 0)),
                  pl.BlockSpec((tr, D), lambda i: (i, 0))],
        out_specs=pl.BlockSpec((tr, D), lambda i: (i, 0)),
        compiler_params=pltpu.CompilerParams(
            dimension_semantics=("parallel",)),
    )(x2, u).reshape(B, S, D)

    # ---- relative position embeddings: Toeplitz rows of an extended table ----
    # ext[j] = table[clip(j - (S-1), -K, K) + K], shape (2S-1, D) -- tiny,
    # built once in the wrapper (plain XLA gather), stays resident in VMEM.
    j = jnp.arange(2 * S - 1)
    ext = table[jnp.clip(j - (S - 1), -K, K) + K]
    tq = tq or _choose_q_tile(S, D)
    rel = pl.pallas_call(
        functools.partial(_relpos_kernel, tq=tq, seq=S),
        out_shape=jax.ShapeDtypeStruct((S, S, D), table.dtype),
        grid=(pl.cdiv(S, tq),),
        in_specs=[pl.BlockSpec((2 * S - 1, D), lambda i: (0, 0))],
        out_specs=pl.BlockSpec((tq, S, D), lambda i: (i, 0, 0)),
        compiler_params=pltpu.CompilerParams(
            dimension_semantics=("parallel",),
            vmem_limit_bytes=48 * 1024 * 1024),
    )(ext)

    return x_drop, rel


if __name__ == "__main__":
    B, S, D = 2, 8, 32
    MAX_REL = 4          # < S so the distance clipping path is exercised
    P_DROP = 0.1

    key = jax.random.PRNGKey(0)
    k_table, k_x, k_drop = jax.random.split(key, 3)

    # matches torch.randn(2K+1, d_model) * 0.1 parameter init (different RNG)
    table = jax.random.normal(k_table, (2 * MAX_REL + 1, D),
                              dtype=jnp.float32) * 0.1
    x = jax.random.normal(k_x, (B, S, D), dtype=jnp.float32)

    # small tiles so the grid machinery actually runs multiple steps
    x_drop, rel = relative_positional_encoding(
        x, table, k_drop, p=P_DROP, max_rel=MAX_REL, tq=4, tr=8)
    jax.block_until_ready((x_drop, rel))

    # --- reference check: the rel-embedding gather is deterministic ---
    rng = jnp.arange(S)
    dist = jnp.clip(rng[None, :] - rng[:, None], -MAX_REL, MAX_REL) + MAX_REL
    rel_expected = table[dist]
    assert rel.shape == (S, S, D)
    assert jnp.allclose(rel, rel_expected, atol=1e-6)

    # --- dropout check: every element is either 0 or x / (1 - p) ---
    scale = 1.0 / (1.0 - P_DROP)
    ok = jnp.logical_or(jnp.isclose(x_drop, 0.0, atol=1e-6),
                        jnp.isclose(x_drop, x * scale, atol=1e-5))
    assert x_drop.shape == (B, S, D)
    assert bool(jnp.all(ok))

    print("KERNEL_OK")
</pallas_src>

<mosaic_0001>
module attributes {stable_mosaic.version = 11 : i64} {
  func.func @_dropout_kernel(%arg0: i32, %arg1: memref<8x32xf32, #tpu.memory_space<vmem>>, %arg2: memref<8x32xf32, #tpu.memory_space<vmem>>, %arg3: memref<8x32xf32, #tpu.memory_space<vmem>>) attributes {dimension_semantics = [#tpu.dimension_semantics<parallel>], iteration_bounds = array<i64: 2>, scalar_prefetch = 0 : i64, scratch_operands = 0 : i64, tpu.core_type = #tpu.core_type<tc>, window_params = [{transform_indices = @transform_0, window_bounds = array<i64: 8, 32>}, {transform_indices = @transform_1, window_bounds = array<i64: 8, 32>}, {transform_indices = @transform_2, window_bounds = array<i64: 8, 32>}]} {
    %c0 = arith.constant 0 : index
    %c0_0 = arith.constant 0 : index
    %0 = vector.load %arg1[%c0, %c0_0] : memref<8x32xf32, #tpu.memory_space<vmem>>, vector<8x32xf32>
    %c0_1 = arith.constant 0 : index
    %c0_2 = arith.constant 0 : index
    %1 = vector.load %arg2[%c0_1, %c0_2] : memref<8x32xf32, #tpu.memory_space<vmem>>, vector<8x32xf32>
    %cst = arith.constant 1.000000e-01 : f32
    %2 = vector.broadcast %cst : f32 to vector<8x32xf32>
    %3 = arith.cmpf oge, %1, %2 : vector<8x32xf32>
    %cst_3 = arith.constant 1.11111116 : f32
    %4 = vector.broadcast %cst_3 : f32 to vector<8x32xf32>
    %5 = arith.mulf %0, %4 : vector<8x32xf32>
    %cst_4 = arith.constant 0.000000e+00 : f32
    %6 = vector.broadcast %cst_4 : f32 to vector<8x32xf32>
    %7 = arith.select %3, %5, %6 : vector<8x32xi1>, vector<8x32xf32>
    %c0_5 = arith.constant 0 : index
    %c0_6 = arith.constant 0 : index
    %8 = vector.load %arg3[%c0_5, %c0_6] : memref<8x32xf32, #tpu.memory_space<vmem>>, vector<8x32xf32>
    tpu.vector_store %arg3[%c0_5, %c0_6], %7 {strides = array<i32>} : memref<8x32xf32, #tpu.memory_space<vmem>>, vector<8x32xf32>,
    return
  }
  func.func @transform_0(%arg0: i32) -> (i32, i32) {
    %c0_i32 = arith.constant 0 : i32
    %c0_i32_0 = arith.constant 0 : i32
    return %arg0, %c0_i32 : i32, i32
  }
  func.func @transform_1(%arg0: i32) -> (i32, i32) {
    %c0_i32 = arith.constant 0 : i32
    %c0_i32_0 = arith.constant 0 : i32
    return %arg0, %c0_i32 : i32, i32
  }
  func.func @transform_2(%arg0: i32) -> (i32, i32) {
    %c0_i32 = arith.constant 0 : i32
    %c0_i32_0 = arith.constant 0 : i32
    return %arg0, %c0_i32 : i32, i32
  }
}

</mosaic_0001>

<llo_original>
// kernel: tpu_custom_call.1
$region0: #{tpu_custom_call.1}
  #allocation0 [shape = 'u32[]', space=smem, size = 0x4, offset = 0x4, fixed_abs, tag = 'smem constant byte address 0x4 - core index']
  #allocation1 [shape = 'u32[144,128]{1,0:T(1,128)}', space=vmem, size = 0x12000, scoped, tag = 'internal scratch']
  %s0 = inlined_call_operand.hbm [shape: f32[16,32], index: 0, kind: input, shape index: {}]
  %s1 = inlined_call_operand.hbm [shape: f32[16,32], index: 1, kind: input, shape index: {}]
  %s2 = inlined_call_operand.hbm [shape: f32[16,32], index: 2, kind: output, shape index: {}]
  %s3 = sld [smem:[#allocation0]]
  $region49: #{tpu_custom_call.1} parent=0
    _
  %s5 = ssub.s32 1, %s3
  %s6 = scalar_select 0, %s5, %s3
  $region1: #{tpu_custom_call.1} parent=0
    #allocation2 [shape = 'u8[8192]{0}', space=vmem, size = 0x2000, scoped, tag = 'input window, operand 0']
    #allocation3 [shape = 's32[2]{0}', space=sflag, size = 0x8, scoped, tag = 'scoped memory for tpu_custom_call.1']
    #allocation4 [shape = 's32[2]{0}', space=sflag, size = 0x8, scoped, tag = 'scoped memory for tpu_custom_call.1']
    #allocation5 [shape = 'u8[8192]{0}', space=vmem, size = 0x2000, scoped, tag = 'input window, operand 1']
    #allocation6 [shape = 's32[2]{0}', space=sflag, size = 0x8, scoped, tag = 'scoped memory for tpu_custom_call.1']
    #allocation7 [shape = 'u8[8192]{0}', space=vmem, size = 0x2000, scoped, tag = 'output window, operand 0']
    %7 = vsyncpa [#allocation3], 0
    %s8 = scalar_lea.sflag [#allocation3], 1
    %9 = vsyncpa %s8, 0
    %10 = vsyncpa [#allocation6], 0
    %s11 = scalar_lea.sflag [#allocation6], 1
    %12 = vsyncpa %s11, 0
    %13 = vsyncpa [#allocation4], 0
    %s14 = scalar_lea.sflag [#allocation4], 1
    %15 = vsyncpa %s14, 0
    loop: start=0, step=1, limit=4
    $region2: #{tpu_custom_call.1} parent=1 // loop_pre_header
      _
    $region3: #{tpu_custom_call.1} parent=1 // loop_header
      %s17 = sphi 0, %s21
      %p18 = scmp.ge.s32.totalorder %s17, 4
      %s27 = sphi 0, %s29
      %s30 = sphi 0, %s27
      %s31 = sphi 0, %s30
      %s47 = sphi 0, %s31
      %s53 = sphi 0, %s55
      %s56 = sphi 0, %s53
      %s57 = sphi 0, %s56
      %s73 = sphi 0, %s57
      %s79 = sphi 0, %s81
      %s82 = sphi 0, %s79
      %s83 = sphi 0, %s82
      %s99 = sphi 0, %s83
    $region4: #{tpu_custom_call.1} parent=1 // loop_header_branch
      %20 = sbr.rel (%p18) target = $region8
    $region5: #{tpu_custom_call.1} parent=1 // loop_body
      %s22 = ssub.s32 %s17, 1
      %s23 = ssub.s32 %s17, 2
      %s24 = sadd.s32 %s17, 1
      %s25 = ssub.s32 %s17, %s24
      %p26 = scmp.eq.s32.totalorder %s25, 0
      %s28 = sadd.s32 %s27, 1
      %s29 = scalar_select %p26, %s27, %s28
      %p32 = pneg %p26
      %p33 = scmp.eq.s32.totalorder %s17, 1
      %p34 = por %p32, %p33
      %p35 = scmp.ne.s32.totalorder %s27, %s30
      %p36 = scmp.eq.s32.totalorder %s17, 0
      %p37 = por %p35, %p36
      %p38 = scmp.ne.s32.totalorder %s27, %s30
      %p39 = scmp.eq.s32.totalorder %s22, 1
      %p40 = por %p38, %p39
      %p41 = scmp.ne.s32.totalorder %s30, %s31
      %p42 = scmp.eq.s32.totalorder %s22, 0
      %p43 = por %p41, %p42
      %p44 = scmp.ne.s32.totalorder %s30, %s31
      %p45 = scmp.eq.s32.totalorder %s23, 1
      %p46 = por %p44, %p45
      %p48 = scmp.ne.s32.totalorder %s31, %s47
      %p49 = scmp.eq.s32.totalorder %s23, 0
      %p50 = por %p48, %p49
      %s51 = ssub.s32 %s17, %s24
      %p52 = scmp.eq.s32.totalorder %s51, 0
      %s54 = sadd.s32 %s53, 1
      %s55 = scalar_select %p52, %s53, %s54
      %p58 = pneg %p52
      %p59 = scmp.eq.s32.totalorder %s17, 1
      %p60 = por %p58, %p59
      %p61 = scmp.ne.s32.totalorder %s53, %s56
      %p62 = scmp.eq.s32.totalorder %s17, 0
      %p63 = por %p61, %p62
      %p64 = scmp.ne.s32.totalorder %s53, %s56
      %p65 = scmp.eq.s32.totalorder %s22, 1
      %p66 = por %p64, %p65
      %p67 = scmp.ne.s32.totalorder %s56, %s57
      %p68 = scmp.eq.s32.totalorder %s22, 0
      %p69 = por %p67, %p68
      %p70 = scmp.ne.s32.totalorder %s56, %s57
      %p71 = scmp.eq.s32.totalorder %s23, 1
      %p72 = por %p70, %p71
      %p74 = scmp.ne.s32.totalorder %s57, %s73
      %p75 = scmp.eq.s32.totalorder %s23, 0
      %p76 = por %p74, %p75
      %s77 = ssub.s32 %s17, %s24
      %p78 = scmp.eq.s32.totalorder %s77, 0
      %s80 = sadd.s32 %s79, 1
      %s81 = scalar_select %p78, %s79, %s80
      %p84 = pneg %p78
      %p85 = scmp.eq.s32.totalorder %s17, 1
      %p86 = por %p84, %p85
      %p87 = scmp.ne.s32.totalorder %s79, %s82
      %p88 = scmp.eq.s32.totalorder %s17, 0
      %p89 = por %p87, %p88
      %p90 = scmp.ne.s32.totalorder %s79, %s82
      %p91 = scmp.eq.s32.totalorder %s22, 1
      %p92 = por %p90, %p91
      %p93 = scmp.ne.s32.totalorder %s82, %s83
      %p94 = scmp.eq.s32.totalorder %s22, 0
      %p95 = por %p93, %p94
      %p96 = scmp.ne.s32.totalorder %s82, %s83
      %p97 = scmp.eq.s32.totalorder %s23, 1
      %p98 = por %p96, %p97
      %p100 = scmp.ne.s32.totalorder %s83, %s99
      %p101 = scmp.eq.s32.totalorder %s23, 0
      %p102 = por %p100, %p101
      %p103 = scmp.le.s32.totalorder 1, %s17
      %p104 = scmp.lt.s32.totalorder %s17, 3
      %p105 = pnand %p103, %p104
      %p106 = pneg %p105
      // Predicated region
      $region9: #{tpu_custom_call.1} parent=5 // pred_check
        _
      $region10: #{tpu_custom_call.1} parent=5 // pred_check_branch
        %108 = sbr.rel (%p105) target = $region12
      $region11: #{tpu_custom_call.1} parent=5 // pred_region
        %s109 = ssub.s32 %s17, 1
      $region12: #{tpu_custom_call.1} parent=5 // pred_fallthru
        _
      %p110 = scmp.lt.s32.totalorder %s17, 2
      // Predicated region
      $region13: #{tpu_custom_call.1} parent=5 // pred_check
        %p111 = pneg %p110
      $region14: #{tpu_custom_call.1} parent=5 // pred_check_branch
        %113 = sbr.rel (%p111) target = $region16
      $region15: #{tpu_custom_call.1} parent=5 // pred_region
        // Predicated region
        $region17: #{tpu_custom_call.1} parent=15 // pred_check
          %p114 = pneg %p37
        $region18: #{tpu_custom_call.1} parent=15 // pred_check_branch
          %116 = sbr.rel (%p114) target = $region20
        $region19: #{tpu_custom_call.1} parent=15 // pred_region
          %s117 = sand.u32 %s27, 1
          %s118 = scalar_lea.sflag [#allocation3], %s117
          %s119 = sand.u32 %s27, 1
          %s120 = smul.addr %s119, 8
          %s121 = scalar_lea.vmem [#allocation2], %s120
          %s123 = ssub.s32 128, 128
          %124 = vsyncadd %s118, %s123
          %s125 = smul.addr %s17, 128
          %s126 = scalar_lea.hbm %s0, %s125
          %s128 = sshll.u32 %s121, 4
          %s129 = int_to_ptr.vmem [resolvable:$true] %s128
          %131 = dma.hbm_to_vmem [thread:$0]  %s126, 128, %s129, %s118
        $region20: #{tpu_custom_call.1} parent=15 // pred_fallthru
          _
        // Predicated region
        $region21: #{tpu_custom_call.1} parent=15 // pred_check
          %p132 = pneg %p63
        $region22: #{tpu_custom_call.1} parent=15 // pred_check_branch
          %134 = sbr.rel (%p132) target = $region24
        $region23: #{tpu_custom_call.1} parent=15 // pred_region
          %s135 = sand.u32 %s53, 1
          %s136 = scalar_lea.sflag [#allocation6], %s135
          %s137 = sand.u32 %s53, 1
          %s138 = smul.addr %s137, 8
          %s139 = scalar_lea.vmem [#allocation5], %s138
          %s141 = ssub.s32 128, 128
          %142 = vsyncadd %s136, %s141
          %s143 = smul.addr %s17, 128
          %s144 = scalar_lea.hbm %s1, %s143
          %s146 = sshll.u32 %s139, 4
          %s147 = int_to_ptr.vmem [resolvable:$true] %s146
          %149 = dma.hbm_to_vmem [thread:$0]  %s144, 128, %s147, %s136
        $region24: #{tpu_custom_call.1} parent=15 // pred_fallthru
          _
      $region16: #{tpu_custom_call.1} parent=5 // pred_fallthru
        _
      %p150 = scmp.le.s32.totalorder 1, %s17
      %p151 = scmp.lt.s32.totalorder %s17, 3
      %p152 = pnand %p150, %p151
      %p153 = pneg %p152
      // Predicated region
      $region25: #{tpu_custom_call.1} parent=5 // pred_check
        _
      $region26: #{tpu_custom_call.1} parent=5 // pred_check_branch
        %155 = sbr.rel (%p152) target = $region28
      $region27: #{tpu_custom_call.1} parent=5 // pred_region
        %s156 = ssub.s32 %s17, 1
        %s157 = sand.u32 %s30, 1
        %s158 = scalar_lea.sflag [#allocation3], %s157
        %s159 = sand.u32 %s30, 1
        %s160 = smul.addr %s159, 8
        %s161 = scalar_lea.vmem [#allocation2], %s160
        // Predicated region
        $region29: #{tpu_custom_call.1} parent=27 // pred_check
          %p162 = pneg %p43
        $region30: #{tpu_custom_call.1} parent=27 // pred_check_branch
          %164 = sbr.rel (%p162) target = $region32
        $region31: #{tpu_custom_call.1} parent=27 // pred_region
          %165 = dma.done %s158, 128
        $region32: #{tpu_custom_call.1} parent=27 // pred_fallthru
          _
        %s166 = sand.u32 %s56, 1
        %s167 = scalar_lea.sflag [#allocation6], %s166
        %s168 = sand.u32 %s56, 1
        %s169 = smul.addr %s168, 8
        %s170 = scalar_lea.vmem [#allocation5], %s169
        // Predicated region
        $region33: #{tpu_custom_call.1} parent=27 // pred_check
          %p171 = pneg %p69
        $region34: #{tpu_custom_call.1} parent=27 // pred_check_branch
          %173 = sbr.rel (%p171) target = $region36
        $region35: #{tpu_custom_call.1} parent=27 // pred_region
          %174 = dma.done %s167, 128
        $region36: #{tpu_custom_call.1} parent=27 // pred_fallthru
          _
        %s175 = sand.u32 %s30, 1
        %s176 = scalar_lea.sflag [#allocation3], %s175
        %s177 = sand.u32 %s30, 1
        %s178 = smul.addr %s177, 8
        %s179 = scalar_lea.vmem [#allocation2], %s178
        %p180 = pneg %p43
        %p181 = pneg %p40
        %s182 = sand.u32 %s56, 1
        %s183 = scalar_lea.sflag [#allocation6], %s182
        %s184 = sand.u32 %s56, 1
        %s185 = smul.addr %s184, 8
        %s186 = scalar_lea.vmem [#allocation5], %s185
        %p187 = pneg %p69
        %p188 = pneg %p66
        %p189 = pneg %p95
        %p190 = pneg %p92
        %s191 = sand.u32 %s82, 1
        %s192 = scalar_lea.sflag [#allocation4], %s191
        %s193 = sand.u32 %s82, 1
        %s194 = smul.addr %s193, 8
        %s195 = scalar_lea.vmem [#allocation7], %s194
        %v196 = vld [vmem:[%s161] sm:$0xff]
        %v197 = vld [vmem:[%s170] sm:$0xff]
        %vm198 = vcmp.ge.f32.partialorder %v197, 0.1
        %v199 = vmul.f32 %v196, 1.1111112
        %v200 = vsel %vm198, %v199, 0.0
        %vm201 = vcmask 261120
        %202 = vst.msk [vmem:[%s195] sm:$0xff] %vm201, %v200
        %s203 = sand.u32 %s82, 1
        %s204 = scalar_lea.sflag [#allocation4], %s203
        %s205 = sand.u32 %s82, 1
        %s206 = smul.addr %s205, 8
        %s207 = scalar_lea.vmem [#allocation7], %s206
        // Predicated region
        $region37: #{tpu_custom_call.1} parent=27 // pred_check
          %p208 = pneg %p92
        $region38: #{tpu_custom_call.1} parent=27 // pred_check_branch
          %210 = sbr.rel (%p208) target = $region40
        $region39: #{tpu_custom_call.1} parent=27 // pred_region
          %s212 = ssub.s32 128, 128
          %213 = vsyncadd %s204, %s212
          %s214 = smul.addr %s22, 128
          %s215 = scalar_lea.hbm %s2, %s214
          %s217 = sshll.u32 %s207, 4
          %s218 = int_to_ptr.vmem [resolvable:$true] %s217
          %220 = dma.vmem_to_hbm [thread:$0]  %s218, 128, %s215, %s204
        $region40: #{tpu_custom_call.1} parent=27 // pred_fallthru
          _
      $region28: #{tpu_custom_call.1} parent=5 // pred_fallthru
        _
      %p221 = scmp.le.s32.totalorder 2, %s17
      // Predicated region
      $region41: #{tpu_custom_call.1} parent=5 // pred_check
        %p222 = pneg %p221
      $region42: #{tpu_custom_call.1} parent=5 // pred_check_branch
        %224 = sbr.rel (%p222) target = $region44
      $region43: #{tpu_custom_call.1} parent=5 // pred_region
        %s225 = ssub.s32 %s17, 2
        // Predicated region
        $region45: #{tpu_custom_call.1} parent=43 // pred_check
          %p226 = pneg %p98
        $region46: #{tpu_custom_call.1} parent=43 // pred_check_branch
          %228 = sbr.rel (%p226) target = $region48
        $region47: #{tpu_custom_call.1} parent=43 // pred_region
          %s229 = sand.u32 %s83, 1
          %s230 = scalar_lea.sflag [#allocation4], %s229
          %s231 = sand.u32 %s83, 1
          %s232 = smul.addr %s231, 8
          %s233 = scalar_lea.vmem [#allocation7], %s232
          %234 = dma.done %s230, 128
        $region48: #{tpu_custom_call.1} parent=43 // pred_fallthru
          _
      $region44: #{tpu_custom_call.1} parent=5 // pred_fallthru
        _
    $region6: #{tpu_custom_call.1} parent=1 // loop_footer
      %s21 = sadd.s32 1, %s17
    $region7: #{tpu_custom_call.1} parent=1 // loop_footer_branch
      %16 = sbr.rel target = $region3
    $region8: #{tpu_custom_call.1} parent=1 // loop_exit
      _
    %235 = vsyncpa [#allocation3], 1
    %s236 = scalar_lea.sflag [#allocation3], 1
    %237 = vsyncpa %s236, 1
    %238 = vsyncpa [#allocation6], 1
    %s239 = scalar_lea.sflag [#allocation6], 1
    %240 = vsyncpa %s239, 1
    %241 = vsyncpa [#allocation4], 1
    %s242 = scalar_lea.sflag [#allocation4], 1
    %243 = vsyncpa %s242, 1

</llo_original>
